<compile_context>
chip_gen: v7x
topology: tpu7x:2x2x1
jax: 0.10.0
libtpu: 0.0.40
codegen_flags: <defaults>
</compile_context>

<pallas_src>
import functools

import jax
import jax.numpy as jnp
from jax import lax
from jax.experimental import pallas as pl
from jax.experimental.pallas import tpu as pltpu


def _bottleneck_kernel(x_ref, mask_ref, w1_ref, b1_ref, w2_ref, b2_ref,
                       w3_ref, b3_ref, out_ref, *, H, W, Bt):
    # x_ref   : (Bt, Cin, n) f32    n = H*W (lane axis), N = Bt*n
    # mask_ref: (8, N)       f32    boundary masks, tap order (ky,kx) row-major
    #                               with the center tap skipped
    # w1_ref  : (P, Cin)  bf16      b1_ref : (P, 1)  f32
    # w2_ref  : (P, 9P)   bf16      b2_ref : (P, 1)  f32   tap-major columns
    # w3_ref  : (P4, P)   bf16      b3_ref : (P4, 1) f32
    # out_ref : (Bt, P4, n) f32
    n = H * W
    N = Bt * n
    Cin = x_ref.shape[1]
    P = w1_ref.shape[0]

    # ---- flatten Bt images onto the lane axis (lane-offset copies only) ----
    if Bt > 1:
        x = jnp.concatenate([x_ref[b] for b in range(Bt)], axis=-1)
    else:
        x = x_ref[0]                                           # (Cin, N) f32

    # ---- conv1 (1x1) + bn1 + relu : one channel matmul ----
    h1 = jnp.dot(w1_ref[...], x.astype(jnp.bfloat16),
                 preferred_element_type=jnp.float32)
    h1 = jnp.maximum(h1 + b1_ref[...], 0.0)                    # (P, N) f32

    # ---- im2col taps: XLU lane rotations + precomputed boundary masks ----
    taps = []
    mi = 0
    for ky in range(3):
        for kx in range(3):
            dy, dx = ky - 1, kx - 1
            if dy == 0 and dx == 0:
                taps.append(h1)                                # center tap
                continue
            off = dy * W + dx
            shifted = pltpu.roll(h1, (-off) % N, axis=1)       # (P, N)
            taps.append(shifted * mask_ref[pl.ds(mi, 1), :])   # mask kills
            mi += 1                                            # wrap lanes

    # ---- conv2 (3x3, pad 1) + bn2 + relu ----
    if 9 * P <= 256:
        # small P: single K=9P matmul on the concatenated stack
        stack = jnp.concatenate(taps, axis=0).astype(jnp.bfloat16)   # (9P, N)
        h2 = jnp.dot(w2_ref[...], stack, preferred_element_type=jnp.float32)
    else:
        # large P: 9 accumulated K=P matmuls, never hold the 9x stack live
        h2 = jnp.zeros((P, N), jnp.float32)
        for t, tap in enumerate(taps):
            h2 = h2 + jnp.dot(w2_ref[:, t * P:(t + 1) * P],
                              tap.astype(jnp.bfloat16),
                              preferred_element_type=jnp.float32)
    h2 = jnp.maximum(h2 + b2_ref[...], 0.0)                    # (P, N) f32

    # ---- conv3 (1x1) + bn3, residual add on the first Cin channels ----
    h3 = jnp.dot(w3_ref[...], h2.astype(jnp.bfloat16),
                 preferred_element_type=jnp.float32)
    res = h3 + b3_ref[...]                                     # (P4, N) f32
    res = jnp.concatenate([res[:Cin] + x, res[Cin:]], axis=0)  # zero-pad add

    # ---- store per-image, lane-aligned lane-dense slices ----
    for b in range(Bt):
        out_ref[b] = res[:, b * n:(b + 1) * n]


def _pick_bt(B, n, target_lanes=1024):
    """Largest divisor of B with Bt*n <= target_lanes (>=1)."""
    bt = max(1, min(B, target_lanes // max(n, 1)))
    while B % bt != 0:
        bt -= 1
    return bt


def bottleneck_tppp(x_cm, w1, b1, w2, b2, w3, b3, *, H, W, Bt=None):
    B, Cin, n = x_cm.shape
    P = w1.shape[0]
    P4 = w3.shape[0]
    assert n == H * W and n % 128 == 0, "H*W must be a multiple of 128"
    if Bt is None:
        Bt = _pick_bt(B, n)
    assert B % Bt == 0
    N = Bt * n

    # Grid-invariant 3x3 boundary masks (one row per off-center tap), computed
    # once here instead of iota+compares every grid step inside the kernel.
    idx = jnp.arange(N, dtype=jnp.int32)
    s = idx % n
    xs = s % W
    ys = s // W
    rows = []
    for ky in range(3):
        for kx in range(3):
            dy, dx = ky - 1, kx - 1
            if dy == 0 and dx == 0:
                continue
            valid = ((ys + dy >= 0) & (ys + dy < H) &
                     (xs + dx >= 0) & (xs + dx < W))
            rows.append(valid.astype(jnp.float32))
    mask = jnp.stack(rows, axis=0)                             # (8, N)

    def full(a):                   # whole-array block, same for every step
        return pl.BlockSpec(a.shape, lambda b: (0,) * a.ndim)

    kernel = functools.partial(_bottleneck_kernel, H=H, W=W, Bt=Bt)
    return pl.pallas_call(
        kernel,
        out_shape=jax.ShapeDtypeStruct((B, P4, n), jnp.float32),
        grid=(B // Bt,),
        in_specs=[
            pl.BlockSpec((Bt, Cin, n), lambda b: (b, 0, 0)),
            full(mask),
            full(w1), full(b1), full(w2), full(b2), full(w3), full(b3),
        ],
        out_specs=pl.BlockSpec((Bt, P4, n), lambda b: (b, 0, 0)),
        compiler_params=pltpu.CompilerParams(
            dimension_semantics=("parallel",),
            vmem_limit_bytes=32 * 1024 * 1024),
    )(x_cm, mask, w1, b1, w2, b2, w3, b3)


def fold_bn(gamma, beta, mean, var, conv_bias, eps=1e-5):
    s = gamma / jnp.sqrt(var + eps)
    return s, beta + (conv_bias - mean) * s


def reference_nchw(x, w1, cb1, p1, w2, cb2, p2, w3, cb3, p3, eps=1e-5):
    dn = ('NCHW', 'OIHW', 'NCHW')

    def bn(z, p):
        g, be, m, v = (t[None, :, None, None] for t in p)
        return (z - m) / jnp.sqrt(v + eps) * g + be

    h = lax.conv_general_dilated(x, w1, (1, 1), 'VALID', dimension_numbers=dn)
    h = jax.nn.relu(bn(h + cb1[None, :, None, None], p1))
    h = lax.conv_general_dilated(h, w2, (1, 1), ((1, 1), (1, 1)),
                                 dimension_numbers=dn)
    h = jax.nn.relu(bn(h + cb2[None, :, None, None], p2))
    h = lax.conv_general_dilated(h, w3, (1, 1), 'VALID', dimension_numbers=dn)
    h = bn(h + cb3[None, :, None, None], p3)
    B, Cin, H, W = x.shape
    pad = jnp.zeros((B, h.shape[1] - Cin, H, W), x.dtype)
    return h + jnp.concatenate([x, pad], axis=1)


if __name__ == "__main__":
    B, Cin, H, W = 2, 4, 16, 16          # x: NCHW (2, 4, 16, 16)
    P = 8                                # planes
    P4 = 4 * P                           # outchannel_ratio = 4

    key = jax.random.PRNGKey(0)
    ks = jax.random.split(key, 16)

    # PyTorch-style parameters (OIHW conv weights, per-channel BN stats)
    w1 = 0.2 * jax.random.normal(ks[0], (P, Cin, 1, 1), jnp.float32)
    w2 = 0.1 * jax.random.normal(ks[1], (P, P, 3, 3), jnp.float32)
    w3 = 0.15 * jax.random.normal(ks[2], (P4, P, 1, 1), jnp.float32)
    cb1 = 0.1 * jax.random.normal(ks[3], (P,), jnp.float32)
    cb2 = 0.1 * jax.random.normal(ks[4], (P,), jnp.float32)
    cb3 = 0.1 * jax.random.normal(ks[5], (P4,), jnp.float32)

    def bn_params(k, c):
        k1, k2, k3, k4 = jax.random.split(k, 4)
        gamma = 1.0 + 0.1 * jax.random.normal(k1, (c,), jnp.float32)
        beta = 0.1 * jax.random.normal(k2, (c,), jnp.float32)
        mean = 0.05 * jax.random.normal(k3, (c,), jnp.float32)
        var = 1.0 + 0.1 * jnp.abs(jax.random.normal(k4, (c,), jnp.float32))
        return gamma, beta, mean, var

    p1 = bn_params(ks[6], P)
    p2 = bn_params(ks[7], P)
    p3 = bn_params(ks[8], P4)

    # Fold BN scale into the conv weights; conv-bias + BN shift into one bias.
    # Matmul operands are bf16 (MXU-native on v6e/v7x); biases stay f32.
    s1, b1 = fold_bn(*p1, cb1)
    s2, b2 = fold_bn(*p2, cb2)
    s3, b3 = fold_bn(*p3, cb3)
    w1cm = (w1[:, :, 0, 0] * s1[:, None]).astype(jnp.bfloat16)            # (P, Cin)
    w2cm = (w2.transpose(0, 2, 3, 1).reshape(P, 9 * P)
            * s2[:, None]).astype(jnp.bfloat16)                           # (P, 9P)
    w3cm = (w3[:, :, 0, 0] * s3[:, None]).astype(jnp.bfloat16)            # (P4, P)
    b1cm, b2cm, b3cm = b1.reshape(P, 1), b2.reshape(P, 1), b3.reshape(P4, 1)

    # Input: NCHW is already channel-major; just flatten the spatial dims.
    x_nchw = jax.random.normal(ks[9], (B, Cin, H, W), jnp.float32)
    x_cm = x_nchw.reshape(B, Cin, H * W)

    out_cm = bottleneck_tppp(x_cm, w1cm, b1cm, w2cm, b2cm, w3cm, b3cm,
                             H=H, W=W)
    out_cm = jax.block_until_ready(out_cm)
    out_nchw = out_cm.reshape(B, P4, H, W)          # back to PyTorch layout

    ref = reference_nchw(x_nchw, w1, cb1, p1, w2, cb2, p2, w3, cb3, p3)
    err = float(jnp.max(jnp.abs(out_nchw - ref)))
    assert out_nchw.shape == (B, P4, H, W), out_nchw.shape
    # Tolerance loosened for bf16 matmul operands (f32 accumulation/epilogues).
    assert err < 5e-2, f"max abs err {err}"
    print("KERNEL_OK")
</pallas_src>

<mosaic_0001>
module attributes {stable_mosaic.version = 11 : i64} {
  func.func @_bottleneck_kernel(%arg0: i32, %arg1: memref<2x4x256xf32, #tpu.memory_space<vmem>>, %arg2: memref<8x512xf32, #tpu.memory_space<vmem>>, %arg3: memref<8x4xbf16, #tpu.memory_space<vmem>>, %arg4: memref<8x1xf32, #tpu.memory_space<vmem>>, %arg5: memref<8x72xbf16, #tpu.memory_space<vmem>>, %arg6: memref<8x1xf32, #tpu.memory_space<vmem>>, %arg7: memref<32x8xbf16, #tpu.memory_space<vmem>>, %arg8: memref<32x1xf32, #tpu.memory_space<vmem>>, %arg9: memref<2x32x256xf32, #tpu.memory_space<vmem>>) attributes {dimension_semantics = [#tpu.dimension_semantics<parallel>], iteration_bounds = array<i64: 1>, scalar_prefetch = 0 : i64, scratch_operands = 0 : i64, tpu.core_type = #tpu.core_type<tc>, window_params = [{transform_indices = @transform_0, window_bounds = array<i64: 2, 4, 256>}, {pipeline_mode = #tpu.pipeline_mode<synchronous>, transform_indices = @transform_1, window_bounds = array<i64: 8, 512>}, {pipeline_mode = #tpu.pipeline_mode<synchronous>, transform_indices = @transform_2, window_bounds = array<i64: 8, 4>}, {pipeline_mode = #tpu.pipeline_mode<synchronous>, transform_indices = @transform_3, window_bounds = array<i64: 8, 1>}, {pipeline_mode = #tpu.pipeline_mode<synchronous>, transform_indices = @transform_4, window_bounds = array<i64: 8, 72>}, {pipeline_mode = #tpu.pipeline_mode<synchronous>, transform_indices = @transform_5, window_bounds = array<i64: 8, 1>}, {pipeline_mode = #tpu.pipeline_mode<synchronous>, transform_indices = @transform_6, window_bounds = array<i64: 32, 8>}, {pipeline_mode = #tpu.pipeline_mode<synchronous>, transform_indices = @transform_7, window_bounds = array<i64: 32, 1>}, {transform_indices = @transform_8, window_bounds = array<i64: 2, 32, 256>}]} {
    %c0 = arith.constant 0 : index
    %c0_0 = arith.constant 0 : index
    %c0_1 = arith.constant 0 : index
    %0 = vector.load %arg1[%c0, %c0_0, %c0_1] : memref<2x4x256xf32, #tpu.memory_space<vmem>>, vector<1x4x256xf32>
    %1 = vector.shape_cast %0 : vector<1x4x256xf32> to vector<4x256xf32>
    %c1 = arith.constant 1 : index
    %c0_2 = arith.constant 0 : index
    %c0_3 = arith.constant 0 : index
    %2 = vector.load %arg1[%c1, %c0_2, %c0_3] : memref<2x4x256xf32, #tpu.memory_space<vmem>>, vector<1x4x256xf32>
    %3 = vector.shape_cast %2 : vector<1x4x256xf32> to vector<4x256xf32>
    %4 = tpu.concatenate %1, %3 in 1 : vector<4x256xf32>, vector<4x256xf32> -> vector<4x512xf32>
    %c0_4 = arith.constant 0 : index
    %c0_5 = arith.constant 0 : index
    %5 = vector.load %arg3[%c0_4, %c0_5] : memref<8x4xbf16, #tpu.memory_space<vmem>>, vector<8x4xbf16>
    %6 = arith.truncf %4 : vector<4x512xf32> to vector<4x512xbf16>
    %cst = arith.constant dense<0.000000e+00> : vector<8x512xf32>
    %7 = tpu.matmul %5, %6, %cst {dimension_numbers = #tpu.dot_dimension_numbers<[1], [0], [0], [1], [0, 0, 1, 1], [], []>} : vector<8x4xbf16>, vector<4x512xbf16>, vector<8x512xf32> -> vector<8x512xf32>
    %c0_6 = arith.constant 0 : index
    %c0_7 = arith.constant 0 : index
    %8 = vector.load %arg4[%c0_6, %c0_7] : memref<8x1xf32, #tpu.memory_space<vmem>>, vector<8x1xf32>
    %9 = vector.broadcast %8 : vector<8x1xf32> to vector<8x512xf32>
    %10 = arith.addf %7, %9 : vector<8x512xf32>
    %cst_8 = arith.constant 0.000000e+00 : f32
    %11 = vector.broadcast %cst_8 : f32 to vector<8x512xf32>
    %12 = arith.maximumf %10, %11 : vector<8x512xf32>
    %c17_i32 = arith.constant 17 : i32
    %13 = tpu.dynamic_rotate %12 by %c17_i32 dim 1 : vector<8x512xf32>, i32 -> vector<8x512xf32>
    %c0_9 = arith.constant 0 : index
    %c0_10 = arith.constant 0 : index
    %14 = vector.load %arg2[%c0_9, %c0_10] : memref<8x512xf32, #tpu.memory_space<vmem>>, vector<1x512xf32>
    %15 = vector.broadcast %14 : vector<1x512xf32> to vector<8x512xf32>
    %16 = arith.mulf %13, %15 : vector<8x512xf32>
    %c16_i32 = arith.constant 16 : i32
    %17 = tpu.dynamic_rotate %12 by %c16_i32 dim 1 : vector<8x512xf32>, i32 -> vector<8x512xf32>
    %c1_11 = arith.constant 1 : index
    %c0_12 = arith.constant 0 : index
    %18 = vector.load %arg2[%c1_11, %c0_12] : memref<8x512xf32, #tpu.memory_space<vmem>>, vector<1x512xf32>
    %19 = vector.broadcast %18 : vector<1x512xf32> to vector<8x512xf32>
    %20 = arith.mulf %17, %19 : vector<8x512xf32>
    %c15_i32 = arith.constant 15 : i32
    %21 = tpu.dynamic_rotate %12 by %c15_i32 dim 1 : vector<8x512xf32>, i32 -> vector<8x512xf32>
    %c2 = arith.constant 2 : index
    %c0_13 = arith.constant 0 : index
    %22 = vector.load %arg2[%c2, %c0_13] : memref<8x512xf32, #tpu.memory_space<vmem>>, vector<1x512xf32>
    %23 = vector.broadcast %22 : vector<1x512xf32> to vector<8x512xf32>
    %24 = arith.mulf %21, %23 : vector<8x512xf32>
    %c1_i32 = arith.constant 1 : i32
    %25 = tpu.dynamic_rotate %12 by %c1_i32 dim 1 : vector<8x512xf32>, i32 -> vector<8x512xf32>
    %c3 = arith.constant 3 : index
    %c0_14 = arith.constant 0 : index
    %26 = vector.load %arg2[%c3, %c0_14] : memref<8x512xf32, #tpu.memory_space<vmem>>, vector<1x512xf32>
    %27 = vector.broadcast %26 : vector<1x512xf32> to vector<8x512xf32>
    %28 = arith.mulf %25, %27 : vector<8x512xf32>
    %c511_i32 = arith.constant 511 : i32
    %29 = tpu.dynamic_rotate %12 by %c511_i32 dim 1 : vector<8x512xf32>, i32 -> vector<8x512xf32>
    %c4 = arith.constant 4 : index
    %c0_15 = arith.constant 0 : index
    %30 = vector.load %arg2[%c4, %c0_15] : memref<8x512xf32, #tpu.memory_space<vmem>>, vector<1x512xf32>
    %31 = vector.broadcast %30 : vector<1x512xf32> to vector<8x512xf32>
    %32 = arith.mulf %29, %31 : vector<8x512xf32>
    %c497_i32 = arith.constant 497 : i32
    %33 = tpu.dynamic_rotate %12 by %c497_i32 dim 1 : vector<8x512xf32>, i32 -> vector<8x512xf32>
    %c5 = arith.constant 5 : index
    %c0_16 = arith.constant 0 : index
    %34 = vector.load %arg2[%c5, %c0_16] : memref<8x512xf32, #tpu.memory_space<vmem>>, vector<1x512xf32>
    %35 = vector.broadcast %34 : vector<1x512xf32> to vector<8x512xf32>
    %36 = arith.mulf %33, %35 : vector<8x512xf32>
    %c496_i32 = arith.constant 496 : i32
    %37 = tpu.dynamic_rotate %12 by %c496_i32 dim 1 : vector<8x512xf32>, i32 -> vector<8x512xf32>
    %c6 = arith.constant 6 : index
    %c0_17 = arith.constant 0 : index
    %38 = vector.load %arg2[%c6, %c0_17] : memref<8x512xf32, #tpu.memory_space<vmem>>, vector<1x512xf32>
    %39 = vector.broadcast %38 : vector<1x512xf32> to vector<8x512xf32>
    %40 = arith.mulf %37, %39 : vector<8x512xf32>
    %c495_i32 = arith.constant 495 : i32
    %41 = tpu.dynamic_rotate %12 by %c495_i32 dim 1 : vector<8x512xf32>, i32 -> vector<8x512xf32>
    %c7 = arith.constant 7 : index
    %c0_18 = arith.constant 0 : index
    %42 = vector.load %arg2[%c7, %c0_18] : memref<8x512xf32, #tpu.memory_space<vmem>>, vector<1x512xf32>
    %43 = vector.broadcast %42 : vector<1x512xf32> to vector<8x512xf32>
    %44 = arith.mulf %41, %43 : vector<8x512xf32>
    %45 = tpu.concatenate %16, %20, %24, %28, %12, %32, %36, %40, %44 in 0 : vector<8x512xf32>, vector<8x512xf32>, vector<8x512xf32>, vector<8x512xf32>, vector<8x512xf32>, vector<8x512xf32>, vector<8x512xf32>, vector<8x512xf32>, vector<8x512xf32> -> vector<72x512xf32>
    %46 = arith.truncf %45 : vector<72x512xf32> to vector<72x512xbf16>
    %c0_19 = arith.constant 0 : index
    %c0_20 = arith.constant 0 : index
    %47 = vector.load %arg5[%c0_19, %c0_20] : memref<8x72xbf16, #tpu.memory_space<vmem>>, vector<8x72xbf16>
    %cst_21 = arith.constant dense<0.000000e+00> : vector<8x512xf32>
    %48 = tpu.matmul %47, %46, %cst_21 {dimension_numbers = #tpu.dot_dimension_numbers<[1], [0], [0], [1], [0, 0, 1, 1], [], []>} : vector<8x72xbf16>, vector<72x512xbf16>, vector<8x512xf32> -> vector<8x512xf32>
    %c0_22 = arith.constant 0 : index
    %c0_23 = arith.constant 0 : index
    %49 = vector.load %arg6[%c0_22, %c0_23] : memref<8x1xf32, #tpu.memory_space<vmem>>, vector<8x1xf32>
    %50 = vector.broadcast %49 : vector<8x1xf32> to vector<8x512xf32>
    %51 = arith.addf %48, %50 : vector<8x512xf32>
    %cst_24 = arith.constant 0.000000e+00 : f32
    %52 = vector.broadcast %cst_24 : f32 to vector<8x512xf32>
    %53 = arith.maximumf %51, %52 : vector<8x512xf32>
    %c0_25 = arith.constant 0 : index
    %c0_26 = arith.constant 0 : index
    %54 = vector.load %arg7[%c0_25, %c0_26] : memref<32x8xbf16, #tpu.memory_space<vmem>>, vector<32x8xbf16>
    %55 = arith.truncf %53 : vector<8x512xf32> to vector<8x512xbf16>
    %cst_27 = arith.constant dense<0.000000e+00> : vector<32x512xf32>
    %56 = tpu.matmul %54, %55, %cst_27 {dimension_numbers = #tpu.dot_dimension_numbers<[1], [0], [0], [1], [0, 0, 1, 1], [], []>} : vector<32x8xbf16>, vector<8x512xbf16>, vector<32x512xf32> -> vector<32x512xf32>
    %c0_28 = arith.constant 0 : index
    %c0_29 = arith.constant 0 : index
    %57 = vector.load %arg8[%c0_28, %c0_29] : memref<32x1xf32, #tpu.memory_space<vmem>>, vector<32x1xf32>
    %58 = vector.broadcast %57 : vector<32x1xf32> to vector<32x512xf32>
    %59 = arith.addf %56, %58 : vector<32x512xf32>
    %60 = vector.extract_strided_slice %59 {offsets = [0, 0], sizes = [4, 512], strides = [1, 1]} : vector<32x512xf32> to vector<4x512xf32>
    %61 = arith.addf %60, %4 : vector<4x512xf32>
    %62 = vector.extract_strided_slice %59 {offsets = [4, 0], sizes = [28, 512], strides = [1, 1]} : vector<32x512xf32> to vector<28x512xf32>
    %63 = tpu.concatenate %61, %62 in 0 : vector<4x512xf32>, vector<28x512xf32> -> vector<32x512xf32>
    %64 = vector.extract_strided_slice %63 {offsets = [0, 0], sizes = [32, 256], strides = [1, 1]} : vector<32x512xf32> to vector<32x256xf32>
    %c0_30 = arith.constant 0 : index
    %c0_31 = arith.constant 0 : index
    %c0_32 = arith.constant 0 : index
    %65 = vector.load %arg9[%c0_30, %c0_31, %c0_32] : memref<2x32x256xf32, #tpu.memory_space<vmem>>, vector<1x32x256xf32>
    %66 = vector.shape_cast %65 : vector<1x32x256xf32> to vector<32x256xf32>
    %67 = vector.shape_cast %64 : vector<32x256xf32> to vector<1x32x256xf32>
    tpu.vector_store %arg9[%c0_30, %c0_31, %c0_32], %67 {strides = array<i32>} : memref<2x32x256xf32, #tpu.memory_space<vmem>>, vector<1x32x256xf32>,
    %68 = vector.extract_strided_slice %63 {offsets = [0, 256], sizes = [32, 256], strides = [1, 1]} : vector<32x512xf32> to vector<32x256xf32>
    %c1_33 = arith.constant 1 : index
    %c0_34 = arith.constant 0 : index
    %c0_35 = arith.constant 0 : index
    %69 = vector.load %arg9[%c1_33, %c0_34, %c0_35] : memref<2x32x256xf32, #tpu.memory_space<vmem>>, vector<1x32x256xf32>
    %70 = vector.shape_cast %69 : vector<1x32x256xf32> to vector<32x256xf32>
    %71 = vector.shape_cast %68 : vector<32x256xf32> to vector<1x32x256xf32>
    tpu.vector_store %arg9[%c1_33, %c0_34, %c0_35], %71 {strides = array<i32>} : memref<2x32x256xf32, #tpu.memory_space<vmem>>, vector<1x32x256xf32>,
    return
  }
  func.func @transform_0(%arg0: i32) -> (i32, i32, i32) {
    %c0_i32 = arith.constant 0 : i32
    %c0_i32_0 = arith.constant 0 : i32
    %c0_i32_1 = arith.constant 0 : i32
    return %arg0, %c0_i32, %c0_i32_0 : i32, i32, i32
  }
  func.func @transform_1(%arg0: i32) -> (i32, i32) {
    %c0_i32 = arith.constant 0 : i32
    %c0_i32_0 = arith.constant 0 : i32
    %c0_i32_1 = arith.constant 0 : i32
    return %c0_i32, %c0_i32_0 : i32, i32
  }
  func.func @transform_2(%arg0: i32) -> (i32, i32) {
    %c0_i32 = arith.constant 0 : i32
    %c0_i32_0 = arith.constant 0 : i32
    %c0_i32_1 = arith.constant 0 : i32
    return %c0_i32, %c0_i32_0 : i32, i32
  }
  func.func @transform_3(%arg0: i32) -> (i32, i32) {
    %c0_i32 = arith.constant 0 : i32
    %c0_i32_0 = arith.constant 0 : i32
    %c0_i32_1 = arith.constant 0 : i32
    return %c0_i32, %c0_i32_0 : i32, i32
  }
  func.func @transform_4(%arg0: i32) -> (i32, i32) {
    %c0_i32 = arith.constant 0 : i32
    %c0_i32_0 = arith.constant 0 : i32
    %c0_i32_1 = arith.constant 0 : i32
    return %c0_i32, %c0_i32_0 : i32, i32
  }
  func.func @transform_5(%arg0: i32) -> (i32, i32) {
    %c0_i32 = arith.constant 0 : i32
    %c0_i32_0 = arith.constant 0 : i32
    %c0_i32_1 = arith.constant 0 : i32
    return %c0_i32, %c0_i32_0 : i32, i32
  }
  func.func @transform_6(%arg0: i32) -> (i32, i32) {
    %c0_i32 = arith.constant 0 : i32
    %c0_i32_0 = arith.constant 0 : i32
    %c0_i32_1 = arith.constant 0 : i32
    return %c0_i32, %c0_i32_0 : i32, i32
  }
  func.func @transform_7(%arg0: i32) -> (i32, i32) {
    %c0_i32 = arith.constant 0 : i32
    %c0_i32_0 = arith.constant 0 : i32
    %c0_i32_1 = arith.constant 0 : i32
    return %c0_i32, %c0_i32_0 : i32, i32
  }
  func.func @transform_8(%arg0: i32) -> (i32, i32, i32) {
    %c0_i32 = arith.constant 0 : i32
    %c0_i32_0 = arith.constant 0 : i32
    %c0_i32_1 = arith.constant 0 : i32
    return %arg0, %c0_i32, %c0_i32_0 : i32, i32, i32
  }
}

</mosaic_0001>

<llo_original>
// kernel: tpu_custom_call.1
$region0: #{tpu_custom_call.1}
  #allocation0 [shape = 'u32[]', space=smem, size = 0x4, offset = 0x4, fixed_abs, tag = 'smem constant byte address 0x4 - core index']
  #allocation1 [shape = 'u32[144,128]{1,0:T(1,128)}', space=vmem, size = 0x12000, scoped, tag = 'internal scratch']
  %s0 = inlined_call_operand.vmem [shape: f32[2,4,256], index: 0, kind: input, shape index: {}]
  %s1 = inlined_call_operand.vmem [shape: f32[8,512], index: 1, kind: input, shape index: {}]
  %s2 = inlined_call_operand.vmem [shape: bf16[8,4], index: 2, kind: input, shape index: {}]
  %s3 = inlined_call_operand.vmem [shape: f32[8,1], index: 3, kind: input, shape index: {}]
  %s4 = inlined_call_operand.vmem [shape: bf16[8,72], index: 4, kind: input, shape index: {}]
  %s5 = inlined_call_operand.vmem [shape: f32[8,1], index: 5, kind: input, shape index: {}]
  %s6 = inlined_call_operand.vmem [shape: bf16[32,8], index: 6, kind: input, shape index: {}]
  %s7 = inlined_call_operand.vmem [shape: f32[32,1], index: 7, kind: input, shape index: {}]
  %s8 = inlined_call_operand.hbm [shape: f32[2,32,256], index: 8, kind: output, shape index: {}]
  %s9 = sld [smem:[#allocation0]]
  $region42: #{tpu_custom_call.1} parent=0
    _
  %s11 = ssub.s32 1, %s9
  %s12 = scalar_select 0, %s11, %s9
  $region1: #{tpu_custom_call.1} parent=0
    #allocation2 [shape = 'u8[65536]{0}', space=vmem, size = 0x10000, scoped, tag = 'output window, operand 0, single buffered']
    #allocation3 [shape = 's32[1]{0}', space=sflag, size = 0x4, scoped, tag = 'scoped memory for tpu_custom_call.1']
    %13 = vsyncpa [#allocation3], 0
    // Predicated region
    $region2: #{tpu_custom_call.1} parent=1 // pred_check
      _
    $region3: #{tpu_custom_call.1} parent=1 // pred_check_branch
      %15 = sbr.rel (0) target = $region5
    $region4: #{tpu_custom_call.1} parent=1 // pred_region
      _
    $region5: #{tpu_custom_call.1} parent=1 // pred_fallthru
      _
    // Predicated region
    $region6: #{tpu_custom_call.1} parent=1 // pred_check
      _
    $region7: #{tpu_custom_call.1} parent=1 // pred_check_branch
      %17 = sbr.rel (0) target = $region9
    $region8: #{tpu_custom_call.1} parent=1 // pred_region
      _
    $region9: #{tpu_custom_call.1} parent=1 // pred_fallthru
      _
    // Predicated region
    $region10: #{tpu_custom_call.1} parent=1 // pred_check
      _
    $region11: #{tpu_custom_call.1} parent=1 // pred_check_branch
      %19 = sbr.rel (0) target = $region13
    $region12: #{tpu_custom_call.1} parent=1 // pred_region
      _
    $region13: #{tpu_custom_call.1} parent=1 // pred_fallthru
      _
    // Predicated region
    $region14: #{tpu_custom_call.1} parent=1 // pred_check
      _
    $region15: #{tpu_custom_call.1} parent=1 // pred_check_branch
      %21 = sbr.rel (0) target = $region17
    $region16: #{tpu_custom_call.1} parent=1 // pred_region
      _
    $region17: #{tpu_custom_call.1} parent=1 // pred_fallthru
      _
    // Predicated region
    $region18: #{tpu_custom_call.1} parent=1 // pred_check
      _
    $region19: #{tpu_custom_call.1} parent=1 // pred_check_branch
      %23 = sbr.rel (0) target = $region21
    $region20: #{tpu_custom_call.1} parent=1 // pred_region
      _
    $region21: #{tpu_custom_call.1} parent=1 // pred_fallthru
      _
    // Predicated region
    $region22: #{tpu_custom_call.1} parent=1 // pred_check
      _
    $region23: #{tpu_custom_call.1} parent=1 // pred_check_branch
      %25 = sbr.rel (0) target = $region25
    $region24: #{tpu_custom_call.1} parent=1 // pred_region
      _
    $region25: #{tpu_custom_call.1} parent=1 // pred_fallthru
      _
    // Predicated region
    $region26: #{tpu_custom_call.1} parent=1 // pred_check
      _
    $region27: #{tpu_custom_call.1} parent=1 // pred_check_branch
      %27 = sbr.rel (0) target = $region29
    $region28: #{tpu_custom_call.1} parent=1 // pred_region
      _
    $region29: #{tpu_custom_call.1} parent=1 // pred_fallthru
      _
    // Predicated region
    $region30: #{tpu_custom_call.1} parent=1 // pred_check
      _
    $region31: #{tpu_custom_call.1} parent=1 // pred_check_branch
      %29 = sbr.rel (0) target = $region33
    $region32: #{tpu_custom_call.1} parent=1 // pred_region
      _
    $region33: #{tpu_custom_call.1} parent=1 // pred_fallthru
      _
    %v31 = vld [vmem:[%s0] sm:$0xff]
    %s32 = scalar_lea.vmem %s0, 8
    %v33 = vld [vmem:[%s32] sm:$0xff]
    %v35 = vcombine.high %v31, %v31
    %v38 = vcombine.high %v33, %v33
    %v40 = vld [vmem:[%s2] sm:$0xf]
    %v41 = vpack.c.bf16 %v31, %v31
    %v42 = vpack.c.bf16 %v35, %v35
    %v43 = vpack.c.bf16 %v33, %v33
    %v44 = vpack.c.bf16 %v38, %v38
    %v45 = vld [vmem:[%s3] sm:$0xff]
    %47 = vset.pattern.permute.xlu0 0
    %48 = vperm.xlu0 %47, %v45
    %v49 = vpop.permute.xlu0 %48
    %vm51 = vcmask 31744
    %v53 = vsel %vm51, %v40, 0
    %vm55 = vcmask 1041408
    %v57 = vsel %vm55, %v41, 0
    %v60 = vsel %vm55, %v42, 0
    %v63 = vsel %vm55, %v43, 0
    %v66 = vsel %vm55, %v44, 0
    %68 = vmatprep.subr.bf16.mxu0 %v60
    %69 = vmatpush1.bf16.msra.mxu0 %v57
    %70 = vmatprep.subr.bf16.mxu0 0
    %71 = vmatpush1.bf16.msra.mxu0 0
    %72 = vmatprep.subr.bf16.mxu0 0
    %73 = vmatpush1.bf16.msra.mxu0 0
    %74 = vmatprep.subr.bf16.mxu0 0
    %75 = vmatpush1.bf16.msra.mxu0 0
    %76 = vmatprep.subr.bf16.mxu0 0
    %77 = vmatpush1.bf16.msra.mxu0 0
    %78 = vmatprep.subr.bf16.mxu0 0
    %79 = vmatpush1.bf16.msra.mxu0 0
    %80 = vmatprep.subr.bf16.mxu0 0
    %81 = vmatpush1.bf16.msra.mxu0 0
    %82 = vmatprep.subr.bf16.mxu0 0
    %83 = vmatpush1.bf16.msra.mxu0 0
    %84 = vmatprep.subr.bf16.mxu0 0
    %85 = vmatpush1.bf16.msra.mxu0 0
    %86 = vmatprep.subr.bf16.mxu0 0
    %87 = vmatpush1.bf16.msra.mxu0 0
    %88 = vmatprep.subr.bf16.mxu0 0
    %89 = vmatpush1.bf16.msra.mxu0 0
    %90 = vmatprep.subr.bf16.mxu0 0
    %91 = vmatpush1.bf16.msra.mxu0 0
    %92 = vmatprep.subr.bf16.mxu0 0
    %93 = vmatpush1.bf16.msra.mxu0 0
    %94 = vmatprep.subr.bf16.mxu0 0
    %95 = vmatpush1.bf16.msra.mxu0 0
    %96 = vmatprep.subr.bf16.mxu0 0
    %97 = vmatpush1.bf16.msra.mxu0 0
    %98 = vmatprep.subr.bf16.mxu0 0
    %99 = vmatpush1.bf16.msra.mxu0 0
    %100 = vmatprep.mubr.bf16.mxu0 0
    %101 = vmatmul.mubr.bf16.gmra.mrb[0].mxu0 %v53
    %v102 = vpop.f32.mrb[0].mxu0
    %v103 = vadd.f32 %v49, %v102
    %v104 = vpop.f32.mrb[0].mxu0
    %v105 = vadd.f32 %v49, %v104
    %v106 = vpop.f32.mrb[0].mxu0
    %v107 = vpop.f32.mrb[0].mxu0
    %108 = vdwg.mxu0
    %109 = vmatprep.subr.bf16.mxu0 %v66
    %110 = vmatpush1.bf16.msra.mxu0 %v63
    %111 = vmatprep.subr.bf16.mxu0 0
    %112 = vmatpush1.bf16.msra.mxu0 0
    %113 = vmatprep.subr.bf16.mxu0 0
    %114 = vmatpush1.bf16.msra.mxu0 0
    %115 = vmatprep.subr.bf16.mxu0 0
    %116 = vmatpush1.bf16.msra.mxu0 0
    %117 = vmatprep.subr.bf16.mxu0 0
    %118 = vmatpush1.bf16.msra.mxu0 0
    %119 = vmatprep.subr.bf16.mxu0 0
    %120 = vmatpush1.bf16.msra.mxu0 0
    %121 = vmatprep.subr.bf16.mxu0 0
    %122 = vmatpush1.bf16.msra.mxu0 0
    %123 = vmatprep.subr.bf16.mxu0 0
    %124 = vmatpush1.bf16.msra.mxu0 0
    %125 = vmatprep.subr.bf16.mxu0 0
    %126 = vmatpush1.bf16.msra.mxu0 0
    %127 = vmatprep.subr.bf16.mxu0 0
    %128 = vmatpush1.bf16.msra.mxu0 0
    %129 = vmatprep.subr.bf16.mxu0 0
    %130 = vmatpush1.bf16.msra.mxu0 0
    %131 = vmatprep.subr.bf16.mxu0 0
    %132 = vmatpush1.bf16.msra.mxu0 0
    %133 = vmatprep.subr.bf16.mxu0 0
    %134 = vmatpush1.bf16.msra.mxu0 0
    %135 = vmatprep.subr.bf16.mxu0 0
    %136 = vmatpush1.bf16.msra.mxu0 0
    %137 = vmatprep.subr.bf16.mxu0 0
    %138 = vmatpush1.bf16.msra.mxu0 0
    %139 = vmatprep.subr.bf16.mxu0 0
    %140 = vmatpush1.bf16.msra.mxu0 0
    %141 = vmatprep.mubr.bf16.mxu0 0
    %142 = vmatmul.mubr.bf16.gmra.mrb[0].mxu0 %v53
    %v143 = vpop.f32.mrb[0].mxu0
    %v144 = vadd.f32 %v49, %v143
    %v145 = vpop.f32.mrb[0].mxu0
    %v146 = vadd.f32 %v49, %v145
    %v147 = vpop.f32.mrb[0].mxu0
    %v148 = vpop.f32.mrb[0].mxu0
    %149 = vdwg.mxu0
    %v150 = vmax.f32 %v103, 0.0
    %v151 = vmax.f32 %v105, 0.0
    %v152 = vmax.f32 %v144, 0.0
    %v153 = vmax.f32 %v146, 0.0
    %154 = vrot.lane.b32.xlu0 %v150, 17
    %v155 = vpop.permute.xlu0 %154
    %156 = vrot.lane.b32.xlu0 %v151, 17
    %v157 = vpop.permute.xlu0 %156
    %158 = vrot.lane.b32.xlu0 %v152, 17
    %v159 = vpop.permute.xlu0 %158
    %160 = vrot.lane.b32.xlu0 %v153, 17
    %v161 = vpop.permute.xlu0 %160
    %v162 = vlaneseq
    %v163 = vand.u32 %v162, 127
    %vm164 = vcmp.lt.s32.totalorder %v163, 17
    %v165 = vsel %vm164, %v159, %v161
    %v166 = vsel %vm164, %v157, %v159
    %v167 = vsel %vm164, %v155, %v157
    %v168 = vsel %vm164, %v161, %v155
    %v169 = vld [vmem:[%s1] ss:$8 sm:$0xf]
    %v171 = vlaneseq
    %v172 = vshrl.u32 %v171, 7
    %v173 = vsub.s32 0, %v172
    %v174 = vrot.slane %v169, %v173
    %v175 = vlaneseq
    %v176 = vshrl.u32 %v175, 7
    %v177 = vsub.s32 1, %v176
    %v178 = vrot.slane %v169, %v177
    %v179 = vlaneseq
    %v180 = vshrl.u32 %v179, 7
    %v181 = vsub.s32 2, %v180
    %v182 = vrot.slane %v169, %v181
    %v183 = vlaneseq
    %v184 = vshrl.u32 %v183, 7
    %v185 = vsub.s32 3, %v184
    %v186 = vrot.slane %v169, %v185
    %v191 = vmul.f32 %v168, %v174
    %v192 = vmul.f32 %v167, %v178
    %v193 = vmul.f32 %v166, %v182
    %v194 = vmul.f32 %v165, %v186
    %195 = vrot.lane.b32.xlu0 %v150, 16
    %v196 = vpop.permute.xlu0 %195
    %197 = vrot.lane.b32.xlu0 %v151, 16
    %v198 = vpop.permute.xlu0 %197
    %199 = vrot.lane.b32.xlu0 %v152, 16
    %v200 = vpop.permute.xlu0 %199
    %201 = vrot.lane.b32.xlu0 %v153, 16
    %v202 = vpop.permute.xlu0 %201
    %vm203 = vcmp.lt.s32.totalorder %v163, 16
    %v204 = vsel %vm203, %v200, %v202
    %v205 = vsel %vm203, %v198, %v200
    %v206 = vsel %vm203, %v196, %v198
    %v207 = vsel %vm203, %v202, %v196
    %s208 = scalar_lea.vmem %s1, 1
    %v209 = vld [vmem:[%s208] ss:$8 sm:$0xf]
    %v211 = vlaneseq
    %v212 = vshrl.u32 %v211, 7
    %v213 = vsub.s32 0, %v212
    %v214 = vrot.slane %v209, %v213
    %v215 = vlaneseq
    %v216 = vshrl.u32 %v215, 7
    %v217 = vsub.s32 1, %v216
    %v218 = vrot.slane %v209, %v217
    %v219 = vlaneseq
    %v220 = vshrl.u32 %v219, 7
    %v221 = vsub.s32 2, %v220
    %v222 = vrot.slane %v209, %v221
    %v223 = vlaneseq
    %v224 = vshrl.u32 %v223, 7
    %v225 = vsub.s32 3, %v224
    %v226 = vrot.slane %v209, %v225
    %v231 = vmul.f32 %v207, %v214
    %v232 = vmul.f32 %v206, %v218
    %v233 = vmul.f32 %v205, %v222
    %v234 = vmul.f32 %v204, %v226
    %235 = vrot.lane.b32.xlu0 %v150, 15
    %v236 = vpop.permute.xlu0 %235
    %237 = vrot.lane.b32.xlu0 %v151, 15
    %v238 = vpop.permute.xlu0 %237
    %239 = vrot.lane.b32.xlu0 %v152, 15
    %v240 = vpop.permute.xlu0 %239
    %241 = vrot.lane.b32.xlu0 %v153, 15
    %v242 = vpop.permute.xlu0 %241
    %vm243 = vcmp.lt.s32.totalorder %v163, 15
    %v244 = vsel %vm243, %v240, %v242
    %v245 = vsel %vm243, %v238, %v240
    %v246 = vsel %vm243, %v236, %v238
    %v247 = vsel %vm243, %v242, %v236
    %s248 = scalar_lea.vmem %s1, 2
    %v249 = vld [vmem:[%s248] ss:$8 sm:$0xf]
    %v251 = vlaneseq
    %v252 = vshrl.u32 %v251, 7
    %v253 = vsub.s32 0, %v252
    %v254 = vrot.slane %v249, %v253
    %v255 = vlaneseq
    %v256 = vshrl.u32 %v255, 7
    %v257 = vsub.s32 1, %v256
    %v258 = vrot.slane %v249, %v257
    %v259 = vlaneseq
    %v260 = vshrl.u32 %v259, 7
    %v261 = vsub.s32 2, %v260
    %v262 = vrot.slane %v249, %v261
    %v263 = vlaneseq
    %v264 = vshrl.u32 %v263, 7
    %v265 = vsub.s32 3, %v264
    %v266 = vrot.slane %v249, %v265
    %v271 = vmul.f32 %v247, %v254
    %v272 = vmul.f32 %v246, %v258
    %v273 = vmul.f32 %v245, %v262
    %v274 = vmul.f32 %v244, %v266
    %275 = vrot.lane.b32.xlu0 %v150, 1
    %v276 = vpop.permute.xlu0 %275
    %277 = vrot.lane.b32.xlu0 %v151, 1
    %v278 = vpop.permute.xlu0 %277
    %279 = vrot.lane.b32.xlu0 %v152, 1
    %v280 = vpop.permute.xlu0 %279
    %281 = vrot.lane.b32.xlu0 %v153, 1
    %v282 = vpop.permute.xlu0 %281
    %vm283 = vcmp.lt.s32.totalorder %v163, 1
    %v284 = vsel %vm283, %v280, %v282
    %v285 = vsel %vm283, %v278, %v280
    %v286 = vsel %vm283, %v276, %v278
    %v287 = vsel %vm283, %v282, %v276
    %s288 = scalar_lea.vmem %s1, 3
    %v289 = vld [vmem:[%s288] ss:$8 sm:$0xf]
    %v291 = vlaneseq
    %v292 = vshrl.u32 %v291, 7
    %v293 = vsub.s32 0, %v292
    %v294 = vrot.slane %v289, %v293
    %v295 = vlaneseq
    %v296 = vshrl.u32 %v295, 7
    %v297 = vsub.s32 1, %v296
    %v298 = vrot.slane %v289, %v297
    %v299 = vlaneseq
    %v300 = vshrl.u32 %v299, 7
    %v301 = vsub.s32 2, %v300
    %v302 = vrot.slane %v289, %v301
    %v303 = vlaneseq
    %v304 = vshrl.u32 %v303, 7
    %v305 = vsub.s32 3, %v304
    %v306 = vrot.slane %v289, %v305
    %v311 = vmul.f32 %v287, %v294
    %v312 = vmul.f32 %v286, %v298
    %v313 = vmul.f32 %v285, %v302
    %v314 = vmul.f32 %v284, %v306
    %315 = vrot.lane.b32.xlu0 %v150, 127
    %v316 = vpop.permute.xlu0 %315
    %317 = vrot.lane.b32.xlu0 %v151, 127
    %v318 = vpop.permute.xlu0 %317
    %319 = vrot.lane.b32.xlu0 %v152, 127
    %v320 = vpop.permute.xlu0 %319
    %321 = vrot.lane.b32.xlu0 %v153, 127
    %v322 = vpop.permute.xlu0 %321
    %vm323 = vcmp.lt.s32.totalorder %v163, 127
    %v324 = vsel %vm323, %v320, %v322
    %v325 = vsel %vm323, %v318, %v320
    %v326 = vsel %vm323, %v316, %v318
    %v327 = vsel %vm323, %v322, %v316
    %s328 = scalar_lea.vmem %s1, 4
    %v329 = vld [vmem:[%s328] ss:$8 sm:$0xf]
    %v331 = vlaneseq
    %v332 = vshrl.u32 %v331, 7
    %v333 = vsub.s32 0, %v332
    %v334 = vrot.slane %v329, %v333
    %v335 = vlaneseq
    %v336 = vshrl.u32 %v335, 7
    %v337 = vsub.s32 1, %v336
    %v338 = vrot.slane %v329, %v337
    %v339 = vlaneseq
    %v340 = vshrl.u32 %v339, 7
    %v341 = vsub.s32 2, %v340
    %v342 = vrot.slane %v329, %v341
    %v343 = vlaneseq
    %v344 = vshrl.u32 %v343, 7
    %v345 = vsub.s32 3, %v344
    %v346 = vrot.slane %v329, %v345
    %v351 = vmul.f32 %v326, %v334
    %v352 = vmul.f32 %v325, %v338
    %v353 = vmul.f32 %v324, %v342
    %v354 = vmul.f32 %v327, %v346
    %355 = vrot.lane.b32.xlu0 %v150, 113
    %v356 = vpop.permute.xlu0 %355
    %357 = vrot.lane.b32.xlu0 %v151, 113
    %v358 = vpop.permute.xlu0 %357
    %359 = vrot.lane.b32.xlu0 %v152, 113
    %v360 = vpop.permute.xlu0 %359
    %361 = vrot.lane.b32.xlu0 %v153, 113
    %v362 = vpop.permute.xlu0 %361
    %vm363 = vcmp.lt.s32.totalorder %v163, 113
    %v364 = vsel %vm363, %v360, %v362
    %v365 = vsel %vm363, %v358, %v360
    %v366 = vsel %vm363, %v356, %v358
    %v367 = vsel %vm363, %v362, %v356
    %s368 = scalar_lea.vmem %s1, 5
    %v369 = vld [vmem:[%s368] ss:$8 sm:$0xf]
    %v371 = vlaneseq
    %v372 = vshrl.u32 %v371, 7
    %v373 = vsub.s32 0, %v372
    %v374 = vrot.slane %v369, %v373
    %v375 = vlaneseq
    %v376 = vshrl.u32 %v375, 7
    %v377 = vsub.s32 1, %v376
    %v378 = vrot.slane %v369, %v377
    %v379 = vlaneseq
    %v380 = vshrl.u32 %v379, 7
    %v381 = vsub.s32 2, %v380
    %v382 = vrot.slane %v369, %v381
    %v383 = vlaneseq
    %v384 = vshrl.u32 %v383, 7
    %v385 = vsub.s32 3, %v384
    %v386 = vrot.slane %v369, %v385
    %v391 = vmul.f32 %v366, %v374
    %v392 = vmul.f32 %v365, %v378
    %v393 = vmul.f32 %v364, %v382
    %v394 = vmul.f32 %v367, %v386
    %395 = vrot.lane.b32.xlu0 %v150, 112
    %v396 = vpop.permute.xlu0 %395
    %397 = vrot.lane.b32.xlu0 %v151, 112
    %v398 = vpop.permute.xlu0 %397
    %399 = vrot.lane.b32.xlu0 %v152, 112
    %v400 = vpop.permute.xlu0 %399
    %401 = vrot.lane.b32.xlu0 %v153, 112
    %v402 = vpop.permute.xlu0 %401
    %vm403 = vcmp.lt.s32.totalorder %v163, 112
    %v404 = vsel %vm403, %v400, %v402
    %v405 = vsel %vm403, %v398, %v400
    %v406 = vsel %vm403, %v396, %v398
    %v407 = vsel %vm403, %v402, %v396
    %s408 = scalar_lea.vmem %s1, 6
    %v409 = vld [vmem:[%s408] ss:$8 sm:$0xf]
    %v411 = vlaneseq
    %v412 = vshrl.u32 %v411, 7
    %v413 = vsub.s32 0, %v412
    %v414 = vrot.slane %v409, %v413
    %v415 = vlaneseq
    %v416 = vshrl.u32 %v415, 7
    %v417 = vsub.s32 1, %v416
    %v418 = vrot.slane %v409, %v417
    %v419 = vlaneseq
    %v420 = vshrl.u32 %v419, 7
    %v421 = vsub.s32 2, %v420
    %v422 = vrot.slane %v409, %v421
    %v423 = vlaneseq
    %v424 = vshrl.u32 %v423, 7
    %v425 = vsub.s32 3, %v424
    %v426 = vrot.slane %v409, %v425
    %v431 = vmul.f32 %v406, %v414
    %v432 = vmul.f32 %v405, %v418
    %v433 = vmul.f32 %v404, %v422
    %v434 = vmul.f32 %v407, %v426
    %435 = vrot.lane.b32.xlu0 %v150, 111
    %v436 = vpop.permute.xlu0 %435
    %437 = vrot.lane.b32.xlu0 %v151, 111
    %v438 = vpop.permute.xlu0 %437
    %439 = vrot.lane.b32.xlu0 %v152, 111
    %v440 = vpop.permute.xlu0 %439
    %441 = vrot.lane.b32.xlu0 %v153, 111
    %v442 = vpop.permute.xlu0 %441
    %vm443 = vcmp.lt.s32.totalorder %v163, 111
    %v444 = vsel %vm443, %v440, %v442
    %v445 = vsel %vm443, %v438, %v440
    %v446 = vsel %vm443, %v436, %v438
    %v447 = vsel %vm443, %v442, %v436
    %s448 = scalar_lea.vmem %s1, 7
    %v449 = vld [vmem:[%s448] ss:$8 sm:$0xf]
    %v451 = vlaneseq
    %v452 = vshrl.u32 %v451, 7
    %v453 = vsub.s32 0, %v452
    %v454 = vrot.slane %v449, %v453
    %v455 = vlaneseq
    %v456 = vshrl.u32 %v455, 7
    %v457 = vsub.s32 1, %v456
    %v458 = vrot.slane %v449, %v457
    %v459 = vlaneseq
    %v460 = vshrl.u32 %v459, 7
    %v461 = vsub.s32 2, %v460
    %v462 = vrot.slane %v449, %v461
    %v463 = vlaneseq
    %v464 = vshrl.u32 %v463, 7
    %v465 = vsub.s32 3, %v464
    %v466 = vrot.slane %v449, %v465
    %v471 = vmul.f32 %v446, %v454
    %v472 = vmul.f32 %v445, %v458
    %v473 = vmul.f32 %v444, %v462
    %v474 = vmul.f32 %v447, %v466
    %v475 = vpack.c.bf16 %v231, %v191
    %v476 = vpack.c.bf16 %v232, %v192
    %v477 = vpack.c.bf16 %v233, %v193
    %v478 = vpack.c.bf16 %v234, %v194
    %v479 = vpack.c.bf16 %v311, %v271
    %v480 = vpack.c.bf16 %v312, %v272
    %v481 = vpack.c.bf16 %v313, %v273
    %v482 = vpack.c.bf16 %v314, %v274
    %v483 = vpack.c.bf16 %v351, %v150
    %v484 = vpack.c.bf16 %v352, %v151
    %v485 = vpack.c.bf16 %v353, %v152
    %v486 = vpack.c.bf16 %v354, %v153
    %v487 = vpack.c.bf16 %v431, %v391
    %v488 = vpack.c.bf16 %v432, %v392
    %v489 = vpack.c.bf16 %v433, %v393
    %v490 = vpack.c.bf16 %v434, %v394
    %v491 = vpack.c.bf16 %v471, %v471
    %v492 = vpack.c.bf16 %v472, %v472
    %v493 = vpack.c.bf16 %v473, %v473
    %v494 = vpack.c.bf16 %v474, %v474
    %v495 = vld [vmem:[%s4] sm:$0xf]
    %v496 = vld [vmem:[%s5] sm:$0xff]
    %498 = vset.pattern.permute.xlu0 0
    %499 = vperm.xlu0 %498, %v496
    %v500 = vpop.permute.xlu0 %499
    %vm502 = vcmask 588800
    %v504 = vsel %vm502, %v495, 0
    %vm506 = vcmask 1043456
    %v508 = vsel %vm506, %v491, 0
    %v511 = vsel %vm506, %v492, 0
    %v514 = vsel %vm506, %v493, 0
    %v517 = vsel %vm506, %v494, 0
    %519 = vmatprep.subr.bf16.mxu0 %v476
    %520 = vmatpush1.bf16.msra.mxu0 %v475
    %521 = vmatprep.subr.bf16.mxu0 %v480
    %522 = vmatpush1.bf16.msra.mxu0 %v479
    %523 = vmatprep.subr.bf16.mxu0 %v484
    %524 = vmatpush1.bf16.msra.mxu0 %v483
    %525 = vmatprep.subr.bf16.mxu0 %v488
    %526 = vmatpush1.bf16.msra.mxu0 %v487
    %527 = vmatprep.subr.bf16.mxu0 %v511
    %528 = vmatpush1.bf16.msra.mxu0 %v508
    %529 = vmatprep.subr.bf16.mxu0 0
    %530 = vmatpush1.bf16.msra.mxu0 0
    %531 = vmatprep.subr.bf16.mxu0 0
    %532 = vmatpush1.bf16.msra.mxu0 0
    %533 = vmatprep.subr.bf16.mxu0 0
    %534 = vmatpush1.bf16.msra.mxu0 0
    %535 = vmatprep.subr.bf16.mxu0 0
    %536 = vmatpush1.bf16.msra.mxu0 0
    %537 = vmatprep.subr.bf16.mxu0 0
    %538 = vmatpush1.bf16.msra.mxu0 0
    %539 = vmatprep.subr.bf16.mxu0 0
    %540 = vmatpush1.bf16.msra.mxu0 0
    %541 = vmatprep.subr.bf16.mxu0 0
    %542 = vmatpush1.bf16.msra.mxu0 0
    %543 = vmatprep.subr.bf16.mxu0 0
    %544 = vmatpush1.bf16.msra.mxu0 0
    %545 = vmatprep.subr.bf16.mxu0 0
    %546 = vmatpush1.bf16.msra.mxu0 0
    %547 = vmatprep.subr.bf16.mxu0 0
    %548 = vmatpush1.bf16.msra.mxu0 0
    %549 = vmatprep.subr.bf16.mxu0 0
    %550 = vmatpush1.bf16.msra.mxu0 0
    %551 = vmatprep.mubr.bf16.mxu0 0
    %552 = vmatmul.mubr.bf16.gmra.mrb[0].mxu0 %v504
    %v553 = vpop.f32.mrb[0].mxu0
    %v554 = vadd.f32 %v500, %v553
    %v555 = vpop.f32.mrb[0].mxu0
    %v556 = vadd.f32 %v500, %v555
    %v557 = vpop.f32.mrb[0].mxu0
    %v558 = vpop.f32.mrb[0].mxu0
    %559 = vdwg.mxu0
    %560 = vmatprep.subr.bf16.mxu0 %v478
    %561 = vmatpush1.bf16.msra.mxu0 %v477
    %562 = vmatprep.subr.bf16.mxu0 %v482
    %563 = vmatpush1.bf16.msra.mxu0 %v481
    %564 = vmatprep.subr.bf16.mxu0 %v486
    %565 = vmatpush1.bf16.msra.mxu0 %v485
    %566 = vmatprep.subr.bf16.mxu0 %v490
    %567 = vmatpush1.bf16.msra.mxu0 %v489
    %568 = vmatprep.subr.bf16.mxu0 %v517
    %569 = vmatpush1.bf16.msra.mxu0 %v514
    %570 = vmatprep.subr.bf16.mxu0 0
    %571 = vmatpush1.bf16.msra.mxu0 0
    %572 = vmatprep.subr.bf16.mxu0 0
    %573 = vmatpush1.bf16.msra.mxu0 0
    %574 = vmatprep.subr.bf16.mxu0 0
    %575 = vmatpush1.bf16.msra.mxu0 0
    %576 = vmatprep.subr.bf16.mxu0 0
    %577 = vmatpush1.bf16.msra.mxu0 0
    %578 = vmatprep.subr.bf16.mxu0 0
    %579 = vmatpush1.bf16.msra.mxu0 0
    %580 = vmatprep.subr.bf16.mxu0 0
    %581 = vmatpush1.bf16.msra.mxu0 0
    %582 = vmatprep.subr.bf16.mxu0 0
    %583 = vmatpush1.bf16.msra.mxu0 0
    %584 = vmatprep.subr.bf16.mxu0 0
    %585 = vmatpush1.bf16.msra.mxu0 0
    %586 = vmatprep.subr.bf16.mxu0 0
    %587 = vmatpush1.bf16.msra.mxu0 0
    %588 = vmatprep.subr.bf16.mxu0 0
    %589 = vmatpush1.bf16.msra.mxu0 0
    %590 = vmatprep.subr.bf16.mxu0 0
    %591 = vmatpush1.bf16.msra.mxu0 0
    %592 = vmatprep.mubr.bf16.mxu0 0
    %593 = vmatmul.mubr.bf16.gmra.mrb[0].mxu0 %v504
    %v594 = vpop.f32.mrb[0].mxu0
    %v595 = vadd.f32 %v500, %v594
    %v596 = vpop.f32.mrb[0].mxu0
    %v597 = vadd.f32 %v500, %v596
    %v598 = vpop.f32.mrb[0].mxu0
    %v599 = vpop.f32.mrb[0].mxu0
    %600 = vdwg.mxu0
    %v601 = vmax.f32 %v554, 0.0
    %v602 = vmax.f32 %v556, 0.0
    %v603 = vmax.f32 %v595, 0.0
    %v604 = vmax.f32 %v597, 0.0
    %v605 = vld [vmem:[%s6] sm:$0xf]
    %v606 = vld [vmem:[%s6 + $0x4] sm:$0xf]
    %v607 = vld [vmem:[%s6 + $0x8] sm:$0xf]
    %v608 = vld [vmem:[%s6 + $0xc] sm:$0xf]
    %v609 = vpack.c.bf16 %v601, %v601
    %v610 = vpack.c.bf16 %v602, %v602
    %v611 = vpack.c.bf16 %v603, %v603
    %v612 = vpack.c.bf16 %v604, %v604
    %v613 = vld [vmem:[%s7] sm:$0xff]
    %v614 = vld [vmem:[%s7 + $0x8] sm:$0xff]
    %v615 = vld [vmem:[%s7 + $0x10] sm:$0xff]
    %v616 = vld [vmem:[%s7 + $0x18] sm:$0xff]
    %618 = vset.pattern.permute.xlu0 0
    %619 = vperm.xlu0 %618, %v613
    %v620 = vpop.permute.xlu0 %619
    %623 = vset.pattern.permute.xlu0 0
    %624 = vperm.xlu0 %623, %v614
    %v625 = vpop.permute.xlu0 %624
    %628 = vset.pattern.permute.xlu0 0
    %629 = vperm.xlu0 %628, %v615
    %v630 = vpop.permute.xlu0 %629
    %633 = vset.pattern.permute.xlu0 0
    %634 = vperm.xlu0 %633, %v616
    %v635 = vpop.permute.xlu0 %634
    %v641 = vunpack.c.l.b16 %v605
    %v642 = vunpack.c.l.b16 %v606
    %v643 = vunpack.c.l.b16 %v607
    %v644 = vunpack.c.l.b16 %v608
    %v645 = vpack.c.b16 %v642, %v641
    %v646 = vpack.c.b16 %v644, %v643
    %vm647 = vcmask 64512
    %v649 = vsel %vm647, %v645, 0
    %v652 = vsel %vm647, %v646, 0
    %v655 = vsel %vm506, %v609, 0
    %v658 = vsel %vm506, %v610, 0
    %v661 = vsel %vm506, %v611, 0
    %v664 = vsel %vm506, %v612, 0
    %666 = vmatprep.subr.bf16.mxu0 %v658
    %667 = vmatpush1.bf16.msra.mxu0 %v655
    %668 = vmatprep.subr.bf16.mxu0 0
    %669 = vmatpush1.bf16.msra.mxu0 0
    %670 = vmatprep.subr.bf16.mxu0 0
    %671 = vmatpush1.bf16.msra.mxu0 0
    %672 = vmatprep.subr.bf16.mxu0 0
    %673 = vmatpush1.bf16.msra.mxu0 0
    %674 = vmatprep.subr.bf16.mxu0 0
    %675 = vmatpush1.bf16.msra.mxu0 0
    %676 = vmatprep.subr.bf16.mxu0 0
    %677 = vmatpush1.bf16.msra.mxu0 0
    %678 = vmatprep.subr.bf16.mxu0 0
    %679 = vmatpush1.bf16.msra.mxu0 0
    %680 = vmatprep.subr.bf16.mxu0 0
    %681 = vmatpush1.bf16.msra.mxu0 0
    %682 = vmatprep.subr.bf16.mxu0 0
    %683 = vmatpush1.bf16.msra.mxu0 0
    %684 = vmatprep.subr.bf16.mxu0 0
    %685 = vmatpush1.bf16.msra.mxu0 0
    %686 = vmatprep.subr.bf16.mxu0 0
    %687 = vmatpush1.bf16.msra.mxu0 0
    %688 = vmatprep.subr.bf16.mxu0 0
    %689 = vmatpush1.bf16.msra.mxu0 0
    %690 = vmatprep.subr.bf16.mxu0 0
    %691 = vmatpush1.bf16.msra.mxu0 0
    %692 = vmatprep.subr.bf16.mxu0 0
    %693 = vmatpush1.bf16.msra.mxu0 0
    %694 = vmatprep.subr.bf16.mxu0 0
    %695 = vmatpush1.bf16.msra.mxu0 0
    %696 = vmatprep.subr.bf16.mxu0 0
    %697 = vmatpush1.bf16.msra.mxu0 0
    %698 = vmatprep.mubr.bf16.mxu0 0
    %699 = vmatmul.mubr.bf16.gmra.mrb[0].mxu0 %v649
    %v700 = vpop.f32.mrb[0].mxu0
    %v701 = vadd.f32 %v620, %v700
    %v702 = vpop.f32.mrb[0].mxu0
    %v703 = vadd.f32 %v620, %v702
    %v704 = vpop.f32.mrb[0].mxu0
    %v705 = vadd.f32 %v625, %v704
    %v706 = vpop.f32.mrb[0].mxu0
    %v707 = vadd.f32 %v625, %v706
    %708 = vmatprep.mubr.bf16.mxu0 0
    %709 = vmatmul.mubr.bf16.gmra.mrb[0].mxu0 %v652
    %v710 = vpop.f32.mrb[0].mxu0
    %v711 = vadd.f32 %v630, %v710
    %v712 = vpop.f32.mrb[0].mxu0
    %v713 = vadd.f32 %v630, %v712
    %v714 = vpop.f32.mrb[0].mxu0
    %v715 = vadd.f32 %v635, %v714
    %v716 = vpop.f32.mrb[0].mxu0
    %v717 = vadd.f32 %v635, %v716
    %718 = vdwg.mxu0
    %719 = vmatprep.subr.bf16.mxu0 %v664
    %720 = vmatpush1.bf16.msra.mxu0 %v661
    %721 = vmatprep.subr.bf16.mxu0 0
    %722 = vmatpush1.bf16.msra.mxu0 0
    %723 = vmatprep.subr.bf16.mxu0 0
    %724 = vmatpush1.bf16.msra.mxu0 0
    %725 = vmatprep.subr.bf16.mxu0 0
    %726 = vmatpush1.bf16.msra.mxu0 0
    %727 = vmatprep.subr.bf16.mxu0 0
    %728 = vmatpush1.bf16.msra.mxu0 0
    %729 = vmatprep.subr.bf16.mxu0 0
    %730 = vmatpush1.bf16.msra.mxu0 0
    %731 = vmatprep.subr.bf16.mxu0 0
    %732 = vmatpush1.bf16.msra.mxu0 0
    %733 = vmatprep.subr.bf16.mxu0 0
    %734 = vmatpush1.bf16.msra.mxu0 0
    %735 = vmatprep.subr.bf16.mxu0 0
    %736 = vmatpush1.bf16.msra.mxu0 0
    %737 = vmatprep.subr.bf16.mxu0 0
    %738 = vmatpush1.bf16.msra.mxu0 0
    %739 = vmatprep.subr.bf16.mxu0 0
    %740 = vmatpush1.bf16.msra.mxu0 0
    %741 = vmatprep.subr.bf16.mxu0 0
    %742 = vmatpush1.bf16.msra.mxu0 0
    %743 = vmatprep.subr.bf16.mxu0 0
    %744 = vmatpush1.bf16.msra.mxu0 0
    %745 = vmatprep.subr.bf16.mxu0 0
    %746 = vmatpush1.bf16.msra.mxu0 0
    %747 = vmatprep.subr.bf16.mxu0 0
    %748 = vmatpush1.bf16.msra.mxu0 0
    %749 = vmatprep.subr.bf16.mxu0 0
    %750 = vmatpush1.bf16.msra.mxu0 0
    %751 = vmatprep.mubr.bf16.mxu0 0
    %752 = vmatmul.mubr.bf16.gmra.mrb[0].mxu0 %v649
    %v753 = vpop.f32.mrb[0].mxu0
    %v754 = vadd.f32 %v620, %v753
    %v755 = vpop.f32.mrb[0].mxu0
    %v756 = vadd.f32 %v620, %v755
    %v757 = vpop.f32.mrb[0].mxu0
    %v758 = vadd.f32 %v625, %v757
    %v759 = vpop.f32.mrb[0].mxu0
    %v760 = vadd.f32 %v625, %v759
    %761 = vmatprep.mubr.bf16.mxu0 0
    %762 = vmatmul.mubr.bf16.gmra.mrb[0].mxu0 %v652
    %v763 = vpop.f32.mrb[0].mxu0
    %v764 = vadd.f32 %v630, %v763
    %v765 = vpop.f32.mrb[0].mxu0
    %v766 = vadd.f32 %v630, %v765
    %v767 = vpop.f32.mrb[0].mxu0
    %v768 = vadd.f32 %v635, %v767
    %v769 = vpop.f32.mrb[0].mxu0
    %v770 = vadd.f32 %v635, %v769
    %771 = vdwg.mxu0
    %v772 = vadd.f32 %v701, %v31
    %v773 = vadd.f32 %v703, %v35
    %v774 = vadd.f32 %v754, %v33
    %v775 = vadd.f32 %v756, %v38
    %v776 = vsel %vm506, %v772, %v701
    %v777 = vsel %vm506, %v773, %v703
    %v778 = vsel %vm506, %v774, %v754
    %v779 = vsel %vm506, %v775, %v756
    %780 = vst [vmem:[#allocation2] sm:$0xff] %v776
    %781 = vst [vmem:[#allocation2 + $0x8] sm:$0xff] %v777
    %782 = vst [vmem:[#allocation2 + $0x10] sm:$0xff] %v705
    %783 = vst [vmem:[#allocation2 + $0x18] sm:$0xff] %v707
    %784 = vst [vmem:[#allocation2 + $0x20] sm:$0xff] %v711
    %785 = vst [vmem:[#allocation2 + $0x28] sm:$0xff] %v713
    %786 = vst [vmem:[#allocation2 + $0x30] sm:$0xff] %v715
    %787 = vst [vmem:[#allocation2 + $0x38] sm:$0xff] %v717
    %s788 = scalar_lea.vmem [#allocation2], 64
    %789 = vst [vmem:[%s788] sm:$0xff] %v778
    %790 = vst [vmem:[%s788 + $0x8] sm:$0xff] %v779
    %791 = vst [vmem:[%s788 + $0x10] sm:$0xff] %v758
    %792 = vst [vmem:[%s788 + $0x18] sm:$0xff] %v760
    %793 = vst [vmem:[%s788 + $0x20] sm:$0xff] %v764
    %794 = vst [vmem:[%s788 + $0x28] sm:$0xff] %v766
    %795 = vst [vmem:[%s788 + $0x30] sm:$0xff] %v768
    %796 = vst [vmem:[%s788 + $0x38] sm:$0xff] %v770
    // Predicated region
    $region34: #{tpu_custom_call.1} parent=1 // pred_check
      _
    $region35: #{tpu_custom_call.1} parent=1 // pred_check_branch
      %798 = sbr.rel (0) target = $region37
    $region36: #{tpu_custom_call.1} parent=1 // pred_region
      %s800 = ssub.s32 2048, 2048
      %801 = vsyncadd [#allocation3], %s800
      %s802 = sshll.u32 [#allocation2], 4
      %s803 = int_to_ptr.vmem [resolvable:$true] %s802
      %808 = dma.vmem_to_hbm [thread:$0]  %s803, 2048, %s8, [#allocation3], 256, 256, 16
    $region37: #{tpu_custom_call.1} parent=1 // pred_fallthru
      _
    // Predicated region
    $region38: #{tpu_custom_call.1} parent=1 // pred_check
      _
    $region39: #{tpu_custom_call.1} parent=1 // pred_check_branch
      %810 = sbr.rel (0) target = $region41
    $region40: #{tpu_custom_call.1} parent=1 // pred_region
      %811 = dma.done [#allocation3], 2048
    $region41: #{tpu_custom_call.1} parent=1 // pred_fallthru
      _
    %812 = vsyncpa [#allocation3], 1

</llo_original>
